<compile_context>
chip_gen: v5e
topology: v5e:2x2
jax: 0.10.0
libtpu: 0.0.40
codegen_flags: <defaults>
</compile_context>

<pallas_src>
import jax
import jax.numpy as jnp
from jax.experimental import pallas as pl
from jax.experimental.pallas import tpu as pltpu

_MAX_DMA_CHUNKS = 4                     # at most 4 DMAs in flight
_MIN_CHUNK_BYTES = 4 * 1024 * 1024      # don't split below ~4 MiB per chunk


def _make_copy_kernel(chunk_bounds):
    """Build a chunked HBM->HBM DMA memcpy kernel.

    chunk_bounds are static leading-axis offsets.  All DMAs are started before
    any wait so the copies overlap on the DMA engines.
    """
    n_chunks = len(chunk_bounds) - 1

    def kernel(x_hbm, o_hbm, sems):
        if n_chunks == 1:
            cp = pltpu.make_async_copy(x_hbm, o_hbm, sems.at[0])
            cp.start()
            cp.wait()
            return
        copies = []
        for c in range(n_chunks):
            lo, hi = chunk_bounds[c], chunk_bounds[c + 1]
            cp = pltpu.make_async_copy(x_hbm.at[lo:hi], o_hbm.at[lo:hi], sems.at[c])
            cp.start()
            copies.append(cp)
        for cp in copies:
            cp.wait()

    return kernel, n_chunks


def _pallas_copy(x, n_chunks=None):
    """Materialized identity copy: fresh buffer filled by direct HBM->HBM DMA."""
    if x.size == 0:
        return x                        # nothing to copy, no kernel launch

    squeeze = x.ndim == 0
    if squeeze:                         # give the DMA a leading axis to slice
        x = x.reshape(1)

    lead = x.shape[0]
    if n_chunks is None:
        size_bytes = x.size * jnp.dtype(x.dtype).itemsize
        n_chunks = min(_MAX_DMA_CHUNKS, lead, max(1, size_bytes // _MIN_CHUNK_BYTES))
    n_chunks = max(1, min(int(n_chunks), lead))

    # Static, roughly equal chunk boundaries along the leading axis.
    step = -(-lead // n_chunks)
    bounds = tuple(sorted({min(lead, c * step) for c in range(n_chunks + 1)}))
    kernel, n_chunks = _make_copy_kernel(bounds)

    y = pl.pallas_call(
        kernel,
        out_shape=jax.ShapeDtypeStruct(x.shape, x.dtype),
        in_specs=[pl.BlockSpec(memory_space=pl.ANY)],   # raw HBM ref, no auto-DMA
        out_specs=pl.BlockSpec(memory_space=pl.ANY),    # write straight to HBM
        scratch_shapes=[pltpu.SemaphoreType.DMA((n_chunks,))],
    )(x)
    return y.reshape(()) if squeeze else y


def identity_pallas(x, materialize=False):
    """Pallas implementation of Identity.forward.

    Default (materialize=False): return x unchanged -- zero FLOPs, zero HBM
    traffic, no kernel launch (the true optimum for Identity, per review).
    materialize=True: return a fresh copy produced by the chunked HBM->HBM DMA
    Pallas kernel, for callers that genuinely need a distinct buffer.
    """
    if not materialize:
        return x
    return _pallas_copy(x)


if __name__ == "__main__":
    key = jax.random.PRNGKey(0)
    k0, k1 = jax.random.split(key)

    # NCHW input consistent with MobileNetV3-style usage.
    x = jax.random.normal(k0, (2, 4, 16, 16), dtype=jnp.float32)

    # Default (optimal) path: Identity returns its input untouched.
    y_fast = identity_pallas(x)
    assert y_fast is x

    # Pallas kernel path: materialized copy via HBM->HBM DMA.
    y = identity_pallas(x, materialize=True)
    jax.block_until_ready(y)
    assert y.shape == x.shape and y.dtype == x.dtype
    assert bool(jnp.all(y == x))

    # Non-128-multiple shape + forced multi-chunk DMA path; no pad/slice needed.
    x_odd = jax.random.normal(k1, (3, 5, 7), dtype=jnp.float32)
    y_odd = _pallas_copy(x_odd, n_chunks=2)
    jax.block_until_ready(y_odd)
    assert y_odd.shape == x_odd.shape and y_odd.dtype == x_odd.dtype
    assert bool(jnp.all(y_odd == x_odd))

    print("KERNEL_OK")
</pallas_src>

<mosaic_0001>
module attributes {stable_mosaic.version = 11 : i64} {
  func.func @kernel(%arg0: memref<2x4x16x16xf32, #tpu.memory_space<any>>, %arg1: memref<2x4x16x16xf32, #tpu.memory_space<any>>, %arg2: memref<1x!tpu.dma_semaphore, #tpu.memory_space<semaphore_mem>>) attributes {dimension_semantics = [], scalar_prefetch = 0 : i64, scratch_operands = 1 : i64, tpu.core_type = #tpu.core_type<tc>} {
    %c0_i32 = arith.constant 0 : i32
    %0 = tpu.memref_slice %arg2[%c0_i32] : memref<1x!tpu.dma_semaphore, #tpu.memory_space<semaphore_mem>> -> memref<1x!tpu.dma_semaphore, #tpu.memory_space<semaphore_mem>>
    %1 = tpu.memref_squeeze %0 : memref<1x!tpu.dma_semaphore, #tpu.memory_space<semaphore_mem>> -> memref<!tpu.dma_semaphore, #tpu.memory_space<semaphore_mem>>
    tpu.enqueue_dma source(%arg0 : memref<2x4x16x16xf32, #tpu.memory_space<any>>) target(%arg1 : memref<2x4x16x16xf32, #tpu.memory_space<any>>) target_semaphore(%1 : memref<!tpu.dma_semaphore, #tpu.memory_space<semaphore_mem>>)
    %c0_i32_0 = arith.constant 0 : i32
    %2 = tpu.memref_slice %arg2[%c0_i32_0] : memref<1x!tpu.dma_semaphore, #tpu.memory_space<semaphore_mem>> -> memref<1x!tpu.dma_semaphore, #tpu.memory_space<semaphore_mem>>
    %3 = tpu.memref_squeeze %2 : memref<1x!tpu.dma_semaphore, #tpu.memory_space<semaphore_mem>> -> memref<!tpu.dma_semaphore, #tpu.memory_space<semaphore_mem>>
    tpu.wait_dma2 semaphore(%3 : memref<!tpu.dma_semaphore, #tpu.memory_space<semaphore_mem>>) src(%arg0 : memref<2x4x16x16xf32, #tpu.memory_space<any>>) dst(%arg1 : memref<2x4x16x16xf32, #tpu.memory_space<any>>)
    return
  }
}

</mosaic_0001>

<llo_original>
// kernel: tpu_custom_call.1
$region0: #{tpu_custom_call.1}
  #allocation0 [shape = 'u32[]', space=smem, size = 0x4, offset = 0x4, fixed_abs, tag = 'smem constant byte address 0x4 - core index']
  #allocation1 [shape = 'u32[72,128]{1,0:T(1,128)}', space=vmem, size = 0x9000, scoped, tag = 'internal scratch']
  #allocation2 [shape = 's32[1]{0}', space=sflag, size = 0x4, scoped, tag = 'scratch operand']
  #allocation3 [shape = 's32[]', space=sflag, size = 0x4, offset = 0, fixed_abs, tag = 'sflag constant byte address 0x0 - dummy sync flag']
  #allocation4 [shape = 'u32[0]{0}', space=smem, size = 0, offset = 0, fixed_abs, tag = 'smem constant byte address 0x0 - null']
  %s0 = inlined_call_operand.hbm [shape: f32[2,4,16,16], index: 0, kind: input, shape index: {}]
  %s1 = inlined_call_operand.hbm [shape: f32[2,4,16,16], index: 1, kind: output, shape index: {}]
  %s2 = sld [smem:[#allocation0]]
  $region2: #{tpu_custom_call.1} parent=0
    _
  %s4 = ssub.s32 1, %s2
  %s5 = scalar_select 0, %s4, %s2
  %s7 = sshll.u32 1, 14
  %s8 = sxor.u32 4294967295, %s7
  %s10 = sshll.u32 %s0, 4
  %s11 = int_to_ptr.hbm [resolvable:$true] %s10
  %s12 = sshll.u32 %s1, 4
  %s13 = int_to_ptr.hbm [resolvable:$true] %s12
  %16 = dma.general %s11, 2048, %s13, [#allocation2], [#allocation3], [#allocation4], 0, 0
  %s17 = smul.u32 2, 4
  %s18 = smul.u32 %s17, 16
  %s19 = smul.u32 %s18, 1
  %s20 = sshll.u32 %s19, 4
  %21 = dma.done [#allocation2], %s20
  %22 = vsyncmov [#allocation2]
  %s23 = vpop.sfrf %22
  %p24 = scmp.eq.s32.totalorder %s23, 0
  %p25 = pneg %p24
  %27 = shalt.err (%p25)

</llo_original>
